<compile_context>
chip_gen: v7x
topology: tpu7x:2x2x1
jax: 0.10.0
libtpu: 0.0.40
codegen_flags: <defaults>
</compile_context>

<pallas_src>
import functools
import math

import jax
import jax.numpy as jnp
from jax.experimental import pallas as pl
from jax.experimental.pallas import tpu as pltpu


def _local_kernel(wm_ref, w0_ref, wp_ref, b_ref, x_ref, o_ref, *, width, d):
    """Fused (1x3)conv + residual + BN(eval) + ReLU on one (1, C, T) tile.

    wm/w0/wp_ref: (C, C) folded tap weights (taps at w-d, w, w+d)
    b_ref:        (C, 1) folded bias
    x_ref/o_ref:  (1, C, T) with T a multiple of `width` (tile = whole rows)
    """
    x = x_ref[0].astype(jnp.float32)                       # (C, T)
    _, T = x.shape

    # Row-boundary masks computed once at (1, T); broadcast over channels.
    pos = jax.lax.broadcasted_iota(jnp.int32, (1, T), 1) % width
    has_left = pos >= d                                    # tap w-d stays in row
    has_right = pos < width - d                            # tap w+d stays in row

    # Stencil neighbours along the lane axis.  Taps that would cross a row
    # boundary are exactly the zero-padded ones, so masking them makes the
    # per-tile roll correct (no halo needed, tile start is row-aligned).
    xm = jnp.where(has_left, pltpu.roll(x, d, axis=1), 0.0)        # x[w-d]
    xp = jnp.where(has_right, pltpu.roll(x, T - d, axis=1), 0.0)   # x[w+d]

    # Channel mix on the MXU: three tiny (C,C)@(C,T) dots (no sublane concat),
    # leaving the VPU with only masks, the bias add and ReLU.
    acc = jnp.dot(wm_ref[...], xm, preferred_element_type=jnp.float32)
    acc = acc + jnp.dot(w0_ref[...], x, preferred_element_type=jnp.float32)
    acc = acc + jnp.dot(wp_ref[...], xp, preferred_element_type=jnp.float32)

    o_ref[0] = jnp.maximum(acc + b_ref[...], 0.0).astype(o_ref.dtype)


def _vmem_capacity_bytes():
    try:
        return pltpu.get_tpu_info().vmem_capacity_bytes
    except Exception:  # interpret mode / non-TPU tracing
        return 64 * 1024 * 1024          # conservative (v7x per-TC)


def _pick_tile(L, W, C, itemsize, n_batch):
    """Tile along H*W: row-aligned (multiple of W), lane-dense (multiple of 128
    where possible), sized against VMEM (I/O double-buffers + in-kernel f32
    temporaries) and split enough to feed both v7x TensorCores."""
    budget = max(_vmem_capacity_bytes() // 16, 2 * 1024 * 1024)  # ~4 MiB v7x, 8 MiB v5e/v6e

    # Per lane-column cost of one tile:
    #   2x double-buffered (in + out) blocks in the I/O dtype, plus ~5 live
    #   f32 (C, tile) temporaries inside the kernel (x, xm, xp, acc, dot out).
    bytes_per_col = C * (4 * itemsize + 5 * 4)
    max_cols = max(budget // bytes_per_col, 128)

    # Keep >= ~4 total grid steps so both v7x TensorCores get work.
    want_per_image = max(-(-4 // max(n_batch, 1)), 1)
    max_cols = min(max_cols, max(-(-L // want_per_image), 1))

    unit = (W * 128) // math.gcd(W, 128)                   # multiple of W and 128
    if L <= max_cols and L <= unit:
        return L                                           # whole image block
    if unit <= max_cols:
        return min((max_cols // unit) * unit, L)
    # lcm(W, 128) alone exceeds the budget (large, awkward W): keep the
    # row+lane alignment that correctness (roll/masks) and unmasked 128-lane
    # stores require, and accept a single over-budget tile.
    return min(unit, L)


def local_forward(x, conv_w, conv_b, gamma, beta, run_mean, run_var,
                  *, eps=1e-5, dila=1, pad=1):
    """Eval-mode forward of `local`: relu(bn(conv1x3(x) + x)); dropout = identity.

    x:      (N, C, H, W)
    conv_w: (C, C, 1, 3)   conv_b: (C,)
    gamma/beta/run_mean/run_var: (C,)
    """
    assert pad == dila, "residual add requires output width == input width"
    d = int(dila)
    N, C, H, W = x.shape
    L = H * W

    # ---- fold residual + BN(eval) into the conv weights / bias (tiny, one-off)
    g = gamma / jnp.sqrt(run_var + eps)                    # (C,)
    w = conv_w[:, :, 0, :]                                 # (C_out, C_in, 3)
    center = jnp.zeros((3,), w.dtype).at[1].set(1.0)
    w_res = w + jnp.eye(C, dtype=w.dtype)[:, :, None] * center[None, None, :]
    w_eff = (g[:, None, None] * w_res).astype(jnp.float32)          # (C, C, 3)
    b_eff = (g * (conv_b - run_mean) + beta).astype(jnp.float32)    # (C,)

    w_m = w_eff[:, :, 0]                                   # tap at w-d
    w_0 = w_eff[:, :, 1]                                   # center tap (+residual)
    w_p = w_eff[:, :, 2]                                   # tap at w+d
    b_pk = b_eff.reshape(C, 1)

    # ---- native-layout kernel: (N, C, H*W), lane axis = H*W (free reshape)
    xr = x.reshape(N, C, L)
    tile = _pick_tile(L, W, C, x.dtype.itemsize, N)
    assert tile % W == 0, (tile, W)                        # roll/mask correctness
    grid = (N, pl.cdiv(L, tile))

    vmem_limit = min(_vmem_capacity_bytes() // 2, 64 * 1024 * 1024)

    out = pl.pallas_call(
        functools.partial(_local_kernel, width=W, d=d),
        out_shape=jax.ShapeDtypeStruct((N, C, L), x.dtype),
        grid_spec=pltpu.PrefetchScalarGridSpec(
            num_scalar_prefetch=0,
            grid=grid,
            in_specs=[
                pl.BlockSpec((C, C), lambda n, t: (0, 0)),   # W_-d
                pl.BlockSpec((C, C), lambda n, t: (0, 0)),   # W_0
                pl.BlockSpec((C, C), lambda n, t: (0, 0)),   # W_+d
                pl.BlockSpec((C, 1), lambda n, t: (0, 0)),   # folded bias
                pl.BlockSpec((1, C, tile), lambda n, t: (n, 0, t)),
            ],
            out_specs=pl.BlockSpec((1, C, tile), lambda n, t: (n, 0, t)),
        ),
        compiler_params=pltpu.CompilerParams(
            dimension_semantics=("parallel", "parallel"),
            vmem_limit_bytes=vmem_limit,
        ),
    )(w_m, w_0, w_p, b_pk, xr)

    return out.reshape(N, C, H, W)


if __name__ == "__main__":
    key = jax.random.PRNGKey(0)
    ks = jax.random.split(key, 7)

    # Small shapes consistent with the module (dim1 -> dim1, 1x3 kernel, pad 1).
    N, C, H, W = 2, 4, 16, 16
    x = jax.random.normal(ks[0], (N, C, H, W), dtype=jnp.float32)

    # PyTorch-style deterministic init.
    fan_in = C * 1 * 3
    bound = 1.0 / math.sqrt(fan_in)
    conv_w = jax.random.uniform(ks[1], (C, C, 1, 3), minval=-bound, maxval=bound,
                                dtype=jnp.float32)
    conv_b = jax.random.uniform(ks[2], (C,), minval=-bound, maxval=bound,
                                dtype=jnp.float32)
    gamma = jax.random.uniform(ks[3], (C,), minval=0.5, maxval=1.5, dtype=jnp.float32)
    beta = jax.random.uniform(ks[4], (C,), minval=-0.5, maxval=0.5, dtype=jnp.float32)
    run_mean = 0.1 * jax.random.normal(ks[5], (C,), dtype=jnp.float32)
    run_var = jax.random.uniform(ks[6], (C,), minval=0.5, maxval=1.5, dtype=jnp.float32)

    out = local_forward(x, conv_w, conv_b, gamma, beta, run_mean, run_var)
    out = jax.block_until_ready(out)

    # Plain-JAX reference: conv(1x3, pad 1) + residual -> BN(eval) -> ReLU.
    eps, d = 1e-5, 1
    xpad = jnp.pad(x, ((0, 0), (0, 0), (0, 0), (d, d)))
    conv = conv_b[None, :, None, None]
    for k in range(3):
        conv = conv + jnp.einsum("oc,nchw->nohw", conv_w[:, :, 0, k],
                                 xpad[:, :, :, k * d:k * d + W])
    v = conv + x
    g = gamma / jnp.sqrt(run_var + eps)
    bn = g[None, :, None, None] * (v - run_mean[None, :, None, None]) \
        + beta[None, :, None, None]
    ref = jnp.maximum(bn, 0.0)

    assert out.shape == (N, C, H, W)
    assert jnp.allclose(out, ref, atol=1e-4, rtol=1e-4), \
        float(jnp.max(jnp.abs(out - ref)))

    print("KERNEL_OK")
</pallas_src>

<mosaic_0001>
module attributes {stable_mosaic.version = 11 : i64} {
  func.func @_local_kernel(%arg0: i32, %arg1: i32, %arg2: memref<4x4xf32, #tpu.memory_space<vmem>>, %arg3: memref<4x4xf32, #tpu.memory_space<vmem>>, %arg4: memref<4x4xf32, #tpu.memory_space<vmem>>, %arg5: memref<4x1xf32, #tpu.memory_space<vmem>>, %arg6: memref<1x4x128xf32, #tpu.memory_space<vmem>>, %arg7: memref<1x4x128xf32, #tpu.memory_space<vmem>>) attributes {dimension_semantics = [#tpu.dimension_semantics<parallel>, #tpu.dimension_semantics<parallel>], iteration_bounds = array<i64: 2, 2>, scalar_prefetch = 0 : i64, scratch_operands = 0 : i64, tpu.core_type = #tpu.core_type<tc>, window_params = [{pipeline_mode = #tpu.pipeline_mode<synchronous>, transform_indices = @transform_0, window_bounds = array<i64: 4, 4>}, {pipeline_mode = #tpu.pipeline_mode<synchronous>, transform_indices = @transform_1, window_bounds = array<i64: 4, 4>}, {pipeline_mode = #tpu.pipeline_mode<synchronous>, transform_indices = @transform_2, window_bounds = array<i64: 4, 4>}, {pipeline_mode = #tpu.pipeline_mode<synchronous>, transform_indices = @transform_3, window_bounds = array<i64: 4, 1>}, {transform_indices = @transform_4, window_bounds = array<i64: 1, 4, 128>}, {transform_indices = @transform_5, window_bounds = array<i64: 1, 4, 128>}]} {
    %c0 = arith.constant 0 : index
    %c0_0 = arith.constant 0 : index
    %c0_1 = arith.constant 0 : index
    %0 = vector.load %arg6[%c0, %c0_0, %c0_1] : memref<1x4x128xf32, #tpu.memory_space<vmem>>, vector<1x4x128xf32>
    %1 = vector.shape_cast %0 : vector<1x4x128xf32> to vector<4x128xf32>
    %2 = tpu.iota {dimensions = array<i32: 1>} : vector<1x128xi32>
    %c16_i32 = arith.constant 16 : i32
    %c0_i32 = arith.constant 0 : i32
    %3 = arith.cmpi eq, %c16_i32, %c0_i32 : i32
    %c1_i32 = arith.constant 1 : i32
    %4 = arith.select %3, %c1_i32, %c16_i32 : i32
    %5 = vector.broadcast %4 : i32 to vector<1x128xi32>
    %6 = arith.remsi %2, %5 : vector<1x128xi32>
    %c0_i32_2 = arith.constant 0 : i32
    %7 = vector.broadcast %c0_i32_2 : i32 to vector<1x128xi32>
    %8 = arith.cmpi ne, %6, %7 : vector<1x128xi32>
    %c0_i32_3 = arith.constant 0 : i32
    %9 = vector.broadcast %c0_i32_3 : i32 to vector<1x128xi32>
    %10 = arith.cmpi slt, %6, %9 : vector<1x128xi32>
    %c0_i32_4 = arith.constant 0 : i32
    %11 = arith.cmpi slt, %4, %c0_i32_4 : i32
    %12 = vector.broadcast %11 : i1 to vector<1x128xi1>
    %13 = vector.broadcast %12 : vector<1x128xi1> to vector<1x128xi1>
    %14 = arith.xori %10, %13 : vector<1x128xi1>
    %15 = arith.andi %14, %8 : vector<1x128xi1>
    %16 = vector.broadcast %4 : i32 to vector<1x128xi32>
    %17 = arith.addi %6, %16 : vector<1x128xi32>
    %18 = arith.select %15, %17, %6 : vector<1x128xi1>, vector<1x128xi32>
    %c1_i32_5 = arith.constant 1 : i32
    %19 = vector.broadcast %c1_i32_5 : i32 to vector<1x128xi32>
    %20 = arith.cmpi sge, %18, %19 : vector<1x128xi32>
    %c15_i32 = arith.constant 15 : i32
    %21 = vector.broadcast %c15_i32 : i32 to vector<1x128xi32>
    %22 = arith.cmpi slt, %18, %21 : vector<1x128xi32>
    %c1_i32_6 = arith.constant 1 : i32
    %23 = tpu.dynamic_rotate %1 by %c1_i32_6 dim 1 : vector<4x128xf32>, i32 -> vector<4x128xf32>
    %cst = arith.constant 0.000000e+00 : f32
    %24 = vector.shape_cast %20 : vector<1x128xi1> to vector<1x128xi1>
    %25 = vector.broadcast %24 : vector<1x128xi1> to vector<4x128xi1>
    %26 = vector.broadcast %cst : f32 to vector<4x128xf32>
    %27 = arith.select %25, %23, %26 : vector<4x128xi1>, vector<4x128xf32>
    %c127_i32 = arith.constant 127 : i32
    %28 = tpu.dynamic_rotate %1 by %c127_i32 dim 1 : vector<4x128xf32>, i32 -> vector<4x128xf32>
    %cst_7 = arith.constant 0.000000e+00 : f32
    %29 = vector.shape_cast %22 : vector<1x128xi1> to vector<1x128xi1>
    %30 = vector.broadcast %29 : vector<1x128xi1> to vector<4x128xi1>
    %31 = vector.broadcast %cst_7 : f32 to vector<4x128xf32>
    %32 = arith.select %30, %28, %31 : vector<4x128xi1>, vector<4x128xf32>
    %c0_8 = arith.constant 0 : index
    %c0_9 = arith.constant 0 : index
    %33 = vector.load %arg2[%c0_8, %c0_9] : memref<4x4xf32, #tpu.memory_space<vmem>>, vector<4x4xf32>
    %cst_10 = arith.constant dense<0.000000e+00> : vector<4x128xf32>
    %34 = tpu.matmul %33, %27, %cst_10 {dimension_numbers = #tpu.dot_dimension_numbers<[1], [0], [0], [1], [0, 0, 1, 1], [], []>} : vector<4x4xf32>, vector<4x128xf32>, vector<4x128xf32> -> vector<4x128xf32>
    %c0_11 = arith.constant 0 : index
    %c0_12 = arith.constant 0 : index
    %35 = vector.load %arg3[%c0_11, %c0_12] : memref<4x4xf32, #tpu.memory_space<vmem>>, vector<4x4xf32>
    %cst_13 = arith.constant dense<0.000000e+00> : vector<4x128xf32>
    %36 = tpu.matmul %35, %1, %cst_13 {dimension_numbers = #tpu.dot_dimension_numbers<[1], [0], [0], [1], [0, 0, 1, 1], [], []>} : vector<4x4xf32>, vector<4x128xf32>, vector<4x128xf32> -> vector<4x128xf32>
    %37 = arith.addf %34, %36 : vector<4x128xf32>
    %c0_14 = arith.constant 0 : index
    %c0_15 = arith.constant 0 : index
    %38 = vector.load %arg4[%c0_14, %c0_15] : memref<4x4xf32, #tpu.memory_space<vmem>>, vector<4x4xf32>
    %cst_16 = arith.constant dense<0.000000e+00> : vector<4x128xf32>
    %39 = tpu.matmul %38, %32, %cst_16 {dimension_numbers = #tpu.dot_dimension_numbers<[1], [0], [0], [1], [0, 0, 1, 1], [], []>} : vector<4x4xf32>, vector<4x128xf32>, vector<4x128xf32> -> vector<4x128xf32>
    %40 = arith.addf %37, %39 : vector<4x128xf32>
    %c0_17 = arith.constant 0 : index
    %c0_18 = arith.constant 0 : index
    %41 = vector.load %arg5[%c0_17, %c0_18] : memref<4x1xf32, #tpu.memory_space<vmem>>, vector<4x1xf32>
    %42 = vector.broadcast %41 : vector<4x1xf32> to vector<4x128xf32>
    %43 = arith.addf %40, %42 : vector<4x128xf32>
    %cst_19 = arith.constant 0.000000e+00 : f32
    %44 = vector.broadcast %cst_19 : f32 to vector<4x128xf32>
    %45 = arith.maximumf %43, %44 : vector<4x128xf32>
    %c0_20 = arith.constant 0 : index
    %c0_21 = arith.constant 0 : index
    %c0_22 = arith.constant 0 : index
    %46 = vector.load %arg7[%c0_20, %c0_21, %c0_22] : memref<1x4x128xf32, #tpu.memory_space<vmem>>, vector<1x4x128xf32>
    %47 = vector.shape_cast %46 : vector<1x4x128xf32> to vector<4x128xf32>
    %48 = vector.shape_cast %45 : vector<4x128xf32> to vector<1x4x128xf32>
    tpu.vector_store %arg7[%c0_20, %c0_21, %c0_22], %48 {strides = array<i32>} : memref<1x4x128xf32, #tpu.memory_space<vmem>>, vector<1x4x128xf32>,
    return
  }
  func.func @transform_0(%arg0: i32, %arg1: i32) -> (i32, i32) {
    %c0_i32 = arith.constant 0 : i32
    %c0_i32_0 = arith.constant 0 : i32
    %c0_i32_1 = arith.constant 0 : i32
    return %c0_i32, %c0_i32_0 : i32, i32
  }
  func.func @transform_1(%arg0: i32, %arg1: i32) -> (i32, i32) {
    %c0_i32 = arith.constant 0 : i32
    %c0_i32_0 = arith.constant 0 : i32
    %c0_i32_1 = arith.constant 0 : i32
    return %c0_i32, %c0_i32_0 : i32, i32
  }
  func.func @transform_2(%arg0: i32, %arg1: i32) -> (i32, i32) {
    %c0_i32 = arith.constant 0 : i32
    %c0_i32_0 = arith.constant 0 : i32
    %c0_i32_1 = arith.constant 0 : i32
    return %c0_i32, %c0_i32_0 : i32, i32
  }
  func.func @transform_3(%arg0: i32, %arg1: i32) -> (i32, i32) {
    %c0_i32 = arith.constant 0 : i32
    %c0_i32_0 = arith.constant 0 : i32
    %c0_i32_1 = arith.constant 0 : i32
    return %c0_i32, %c0_i32_0 : i32, i32
  }
  func.func @transform_4(%arg0: i32, %arg1: i32) -> (i32, i32, i32) {
    %c0_i32 = arith.constant 0 : i32
    %c0_i32_0 = arith.constant 0 : i32
    return %arg0, %c0_i32, %arg1 : i32, i32, i32
  }
  func.func @transform_5(%arg0: i32, %arg1: i32) -> (i32, i32, i32) {
    %c0_i32 = arith.constant 0 : i32
    %c0_i32_0 = arith.constant 0 : i32
    return %arg0, %c0_i32, %arg1 : i32, i32, i32
  }
}

</mosaic_0001>

<llo_original>
// kernel: tpu_custom_call.1
$region0: #{tpu_custom_call.1}
  #allocation0 [shape = 'u32[]', space=smem, size = 0x4, offset = 0x4, fixed_abs, tag = 'smem constant byte address 0x4 - core index']
  #allocation1 [shape = 'u32[144,128]{1,0:T(1,128)}', space=vmem, size = 0x12000, scoped, tag = 'internal scratch']
  %s0 = inlined_call_operand.vmem [shape: f32[4,4], index: 0, kind: input, shape index: {}]
  %s1 = inlined_call_operand.hbm [shape: f32[4,4], index: 1, kind: input, shape index: {}]
  %s2 = inlined_call_operand.hbm [shape: f32[4,4], index: 2, kind: input, shape index: {}]
  %s3 = inlined_call_operand.vmem [shape: f32[4,1], index: 3, kind: input, shape index: {}]
  %s4 = inlined_call_operand.vmem [shape: f32[2,4,256], index: 4, kind: input, shape index: {}]
  %s5 = inlined_call_operand.hbm [shape: f32[2,4,256], index: 5, kind: output, shape index: {}]
  %s6 = sld [smem:[#allocation0]]
  $region61: #{tpu_custom_call.1} parent=0
    _
  %s8 = ssub.s32 1, %s6
  %s9 = scalar_select 0, %s8, %s6
  $region1: #{tpu_custom_call.1} parent=0
    #allocation2 [shape = 'u8[2048]{0}', space=vmem, size = 0x800, scoped, tag = 'input window, operand 1, single buffered']
    #allocation3 [shape = 's32[2]{0}', space=sflag, size = 0x8, scoped, tag = 'scoped memory for tpu_custom_call.1']
    #allocation4 [shape = 's32[2]{0}', space=sflag, size = 0x8, scoped, tag = 'scoped memory for tpu_custom_call.1']
    #allocation5 [shape = 'u8[2048]{0}', space=vmem, size = 0x800, scoped, tag = 'input window, operand 2, single buffered']
    #allocation6 [shape = 's32[1]{0}', space=sflag, size = 0x4, scoped, tag = 'scoped memory for tpu_custom_call.1']
    #allocation7 [shape = 'u8[4096]{0}', space=vmem, size = 0x1000, scoped, tag = 'output window, operand 0']
    %10 = vsyncpa [#allocation3], 0
    %11 = vsyncpa [#allocation6], 0
    %12 = vsyncpa [#allocation4], 0
    %s13 = scalar_lea.sflag [#allocation4], 1
    %14 = vsyncpa %s13, 0
    loop: start=0, step=1, limit=6
    $region2: #{tpu_custom_call.1} parent=1 // loop_pre_header
      _
    $region3: #{tpu_custom_call.1} parent=1 // loop_header
      %s16 = sphi 0, %s20
      %p17 = scmp.ge.s32.totalorder %s16, 6
      %s23 = sphi 0, %s35
      %s24 = sphi 0, %s31
      %s25 = sphi 0, %s23
      %s26 = sphi 0, %s24
      %s27 = sphi 0, %s25
      %s28 = sphi 0, %s26
      %s36 = sphi 0, %s36
      %s38 = sphi 0, %s36
      %s39 = sphi 0, %s38
      %s53 = sphi 0, %s39
      %s57 = sphi 0, %s57
      %s59 = sphi 0, %s57
      %s60 = sphi 0, %s59
      %s74 = sphi 0, %s60
      %s78 = sphi 0, %s78
      %s80 = sphi 0, %s78
      %s81 = sphi 0, %s80
      %s95 = sphi 0, %s81
      %s99 = sphi 0, %s99
      %s101 = sphi 0, %s99
      %s102 = sphi 0, %s101
      %s116 = sphi 0, %s102
      %s124 = sphi 0, %s126
      %s127 = sphi 0, %s124
      %s128 = sphi 0, %s127
      %s144 = sphi 0, %s128
      %s152 = sphi 0, %s154
      %s155 = sphi 0, %s152
      %s156 = sphi 0, %s155
      %s172 = sphi 0, %s156
    $region4: #{tpu_custom_call.1} parent=1 // loop_header_branch
      %19 = sbr.rel (%p17) target = $region8
    $region5: #{tpu_custom_call.1} parent=1 // loop_body
      %s21 = ssub.s32 %s16, 1
      %s22 = ssub.s32 %s16, 2
      %s29 = sadd.s32 1, %s24
      %p30 = scmp.ge.s32.totalorder %s29, 2
      %s31 = scalar_select %p30, 0, %s29
      %s32 = sadd.s32 1, %s23
      %s33 = scalar_select %p30, %s32, %s23
      %p34 = scmp.ge.s32.totalorder %s33, 2
      %s35 = scalar_select %p34, 0, %s33
      %s37 = sadd.s32 %s36, 1
      %p40 = scmp.eq.s32.totalorder %s16, 3
      %p41 = scmp.ne.s32.totalorder %s36, %s38
      %p42 = scmp.eq.s32.totalorder %s16, 0
      %p43 = por %p41, %p42
      %p44 = scmp.ne.s32.totalorder %s36, %s38
      %p45 = scmp.eq.s32.totalorder %s21, 3
      %p46 = por %p44, %p45
      %p47 = scmp.ne.s32.totalorder %s38, %s39
      %p48 = scmp.eq.s32.totalorder %s21, 0
      %p49 = por %p47, %p48
      %p50 = scmp.ne.s32.totalorder %s38, %s39
      %p51 = scmp.eq.s32.totalorder %s22, 3
      %p52 = por %p50, %p51
      %p54 = scmp.ne.s32.totalorder %s39, %s53
      %p55 = scmp.eq.s32.totalorder %s22, 0
      %p56 = por %p54, %p55
      %s58 = sadd.s32 %s57, 1
      %p61 = scmp.eq.s32.totalorder %s16, 3
      %p62 = scmp.ne.s32.totalorder %s57, %s59
      %p63 = scmp.eq.s32.totalorder %s16, 0
      %p64 = por %p62, %p63
      %p65 = scmp.ne.s32.totalorder %s57, %s59
      %p66 = scmp.eq.s32.totalorder %s21, 3
      %p67 = por %p65, %p66
      %p68 = scmp.ne.s32.totalorder %s59, %s60
      %p69 = scmp.eq.s32.totalorder %s21, 0
      %p70 = por %p68, %p69
      %p71 = scmp.ne.s32.totalorder %s59, %s60
      %p72 = scmp.eq.s32.totalorder %s22, 3
      %p73 = por %p71, %p72
      %p75 = scmp.ne.s32.totalorder %s60, %s74
      %p76 = scmp.eq.s32.totalorder %s22, 0
      %p77 = por %p75, %p76
      %s79 = sadd.s32 %s78, 1
      %p82 = scmp.eq.s32.totalorder %s16, 3
      %p83 = scmp.ne.s32.totalorder %s78, %s80
      %p84 = scmp.eq.s32.totalorder %s16, 0
      %p85 = por %p83, %p84
      %p86 = scmp.ne.s32.totalorder %s78, %s80
      %p87 = scmp.eq.s32.totalorder %s21, 3
      %p88 = por %p86, %p87
      %p89 = scmp.ne.s32.totalorder %s80, %s81
      %p90 = scmp.eq.s32.totalorder %s21, 0
      %p91 = por %p89, %p90
      %p92 = scmp.ne.s32.totalorder %s80, %s81
      %p93 = scmp.eq.s32.totalorder %s22, 3
      %p94 = por %p92, %p93
      %p96 = scmp.ne.s32.totalorder %s81, %s95
      %p97 = scmp.eq.s32.totalorder %s22, 0
      %p98 = por %p96, %p97
      %s100 = sadd.s32 %s99, 1
      %p103 = scmp.eq.s32.totalorder %s16, 3
      %p104 = scmp.ne.s32.totalorder %s99, %s101
      %p105 = scmp.eq.s32.totalorder %s16, 0
      %p106 = por %p104, %p105
      %p107 = scmp.ne.s32.totalorder %s99, %s101
      %p108 = scmp.eq.s32.totalorder %s21, 3
      %p109 = por %p107, %p108
      %p110 = scmp.ne.s32.totalorder %s101, %s102
      %p111 = scmp.eq.s32.totalorder %s21, 0
      %p112 = por %p110, %p111
      %p113 = scmp.ne.s32.totalorder %s101, %s102
      %p114 = scmp.eq.s32.totalorder %s22, 3
      %p115 = por %p113, %p114
      %p117 = scmp.ne.s32.totalorder %s102, %s116
      %p118 = scmp.eq.s32.totalorder %s22, 0
      %p119 = por %p117, %p118
      %s120 = ssub.s32 %s23, %s35
      %s121 = ssub.s32 %s24, %s31
      %s122 = sor.u32 %s120, %s121
      %p123 = scmp.eq.s32.totalorder %s122, 0
      %s125 = sadd.s32 %s124, 1
      %s126 = scalar_select %p123, %s124, %s125
      %p129 = pneg %p123
      %p130 = scmp.eq.s32.totalorder %s16, 3
      %p131 = por %p129, %p130
      %p132 = scmp.ne.s32.totalorder %s124, %s127
      %p133 = scmp.eq.s32.totalorder %s16, 0
      %p134 = por %p132, %p133
      %p135 = scmp.ne.s32.totalorder %s124, %s127
      %p136 = scmp.eq.s32.totalorder %s21, 3
      %p137 = por %p135, %p136
      %p138 = scmp.ne.s32.totalorder %s127, %s128
      %p139 = scmp.eq.s32.totalorder %s21, 0
      %p140 = por %p138, %p139
      %p141 = scmp.ne.s32.totalorder %s127, %s128
      %p142 = scmp.eq.s32.totalorder %s22, 3
      %p143 = por %p141, %p142
      %p145 = scmp.ne.s32.totalorder %s128, %s144
      %p146 = scmp.eq.s32.totalorder %s22, 0
      %p147 = por %p145, %p146
      %s148 = ssub.s32 %s23, %s35
      %s149 = ssub.s32 %s24, %s31
      %s150 = sor.u32 %s148, %s149
      %p151 = scmp.eq.s32.totalorder %s150, 0
      %s153 = sadd.s32 %s152, 1
      %s154 = scalar_select %p151, %s152, %s153
      %p157 = pneg %p151
      %p158 = scmp.eq.s32.totalorder %s16, 3
      %p159 = por %p157, %p158
      %p160 = scmp.ne.s32.totalorder %s152, %s155
      %p161 = scmp.eq.s32.totalorder %s16, 0
      %p162 = por %p160, %p161
      %p163 = scmp.ne.s32.totalorder %s152, %s155
      %p164 = scmp.eq.s32.totalorder %s21, 3
      %p165 = por %p163, %p164
      %p166 = scmp.ne.s32.totalorder %s155, %s156
      %p167 = scmp.eq.s32.totalorder %s21, 0
      %p168 = por %p166, %p167
      %p169 = scmp.ne.s32.totalorder %s155, %s156
      %p170 = scmp.eq.s32.totalorder %s22, 3
      %p171 = por %p169, %p170
      %p173 = scmp.ne.s32.totalorder %s156, %s172
      %p174 = scmp.eq.s32.totalorder %s22, 0
      %p175 = por %p173, %p174
      %p176 = scmp.le.s32.totalorder 1, %s16
      %p177 = scmp.lt.s32.totalorder %s16, 5
      %p178 = pnand %p176, %p177
      %p179 = pneg %p178
      // Predicated region
      $region9: #{tpu_custom_call.1} parent=5 // pred_check
        _
      $region10: #{tpu_custom_call.1} parent=5 // pred_check_branch
        %181 = sbr.rel (%p178) target = $region12
      $region11: #{tpu_custom_call.1} parent=5 // pred_region
        %s182 = ssub.s32 %s16, 1
        // Predicated region
        $region13: #{tpu_custom_call.1} parent=11 // pred_check
          %p183 = pneg %p49
        $region14: #{tpu_custom_call.1} parent=11 // pred_check_branch
          %185 = sbr.rel (%p183) target = $region16
        $region15: #{tpu_custom_call.1} parent=11 // pred_region
          _
        $region16: #{tpu_custom_call.1} parent=11 // pred_fallthru
          _
        // Predicated region
        $region17: #{tpu_custom_call.1} parent=11 // pred_check
          %p186 = pneg %p70
        $region18: #{tpu_custom_call.1} parent=11 // pred_check_branch
          %188 = sbr.rel (%p186) target = $region20
        $region19: #{tpu_custom_call.1} parent=11 // pred_region
          %s190 = ssub.s32 64, 64
          %191 = vsyncadd [#allocation3], %s190
          %s193 = sshll.u32 [#allocation2], 4
          %s194 = int_to_ptr.vmem [resolvable:$true] %s193
          %196 = dma.hbm_to_vmem [thread:$0]  %s1, 64, %s194, [#allocation3]
        $region20: #{tpu_custom_call.1} parent=11 // pred_fallthru
          _
        // Predicated region
        $region21: #{tpu_custom_call.1} parent=11 // pred_check
          %p197 = pneg %p91
        $region22: #{tpu_custom_call.1} parent=11 // pred_check_branch
          %199 = sbr.rel (%p197) target = $region24
        $region23: #{tpu_custom_call.1} parent=11 // pred_region
          %s201 = ssub.s32 64, 64
          %202 = vsyncadd [#allocation6], %s201
          %s204 = sshll.u32 [#allocation5], 4
          %s205 = int_to_ptr.vmem [resolvable:$true] %s204
          %207 = dma.hbm_to_vmem [thread:$0]  %s2, 64, %s205, [#allocation6]
        $region24: #{tpu_custom_call.1} parent=11 // pred_fallthru
          _
        // Predicated region
        $region25: #{tpu_custom_call.1} parent=11 // pred_check
          %p208 = pneg %p112
        $region26: #{tpu_custom_call.1} parent=11 // pred_check_branch
          %210 = sbr.rel (%p208) target = $region28
        $region27: #{tpu_custom_call.1} parent=11 // pred_region
          _
        $region28: #{tpu_custom_call.1} parent=11 // pred_fallthru
          _
      $region12: #{tpu_custom_call.1} parent=5 // pred_fallthru
        _
      %p211 = scmp.lt.s32.totalorder %s16, 4
      // Predicated region
      $region29: #{tpu_custom_call.1} parent=5 // pred_check
        %p212 = pneg %p211
      $region30: #{tpu_custom_call.1} parent=5 // pred_check_branch
        %214 = sbr.rel (%p212) target = $region32
      $region31: #{tpu_custom_call.1} parent=5 // pred_region
        // Predicated region
        $region33: #{tpu_custom_call.1} parent=31 // pred_check
          %p215 = pneg %p134
        $region34: #{tpu_custom_call.1} parent=31 // pred_check_branch
          %217 = sbr.rel (%p215) target = $region36
        $region35: #{tpu_custom_call.1} parent=31 // pred_region
          %p218 = scmp.lt.s32.totalorder %s23, 1
          %s219 = scalar_select %p218, %s23, 1
          %p220 = scmp.lt.s32.totalorder %s24, 1
          %s221 = scalar_select %p220, %s24, 1
          %s222 = smul.addr %s219, 2
          %s223 = sadd.s32 %s221, %s222
          %s224 = smul.addr %s223, 4
          %s225 = scalar_lea.vmem %s4, %s224
        $region36: #{tpu_custom_call.1} parent=31 // pred_fallthru
          _
      $region32: #{tpu_custom_call.1} parent=5 // pred_fallthru
        _
      %p226 = scmp.le.s32.totalorder 1, %s16
      %p227 = scmp.lt.s32.totalorder %s16, 5
      %p228 = pnand %p226, %p227
      %p229 = pneg %p228
      // Predicated region
      $region37: #{tpu_custom_call.1} parent=5 // pred_check
        _
      $region38: #{tpu_custom_call.1} parent=5 // pred_check_branch
        %231 = sbr.rel (%p228) target = $region40
      $region39: #{tpu_custom_call.1} parent=5 // pred_region
        %s232 = ssub.s32 %s16, 1
        // Predicated region
        $region41: #{tpu_custom_call.1} parent=39 // pred_check
          %p233 = pneg %p70
        $region42: #{tpu_custom_call.1} parent=39 // pred_check_branch
          %235 = sbr.rel (%p233) target = $region44
        $region43: #{tpu_custom_call.1} parent=39 // pred_region
          %236 = dma.done [#allocation3], 64
        $region44: #{tpu_custom_call.1} parent=39 // pred_fallthru
          _
        // Predicated region
        $region45: #{tpu_custom_call.1} parent=39 // pred_check
          %p237 = pneg %p91
        $region46: #{tpu_custom_call.1} parent=39 // pred_check_branch
          %239 = sbr.rel (%p237) target = $region48
        $region47: #{tpu_custom_call.1} parent=39 // pred_region
          %240 = dma.done [#allocation6], 64
        $region48: #{tpu_custom_call.1} parent=39 // pred_fallthru
          _
        %p241 = pneg %p49
        %p242 = pneg %p46
        %p243 = pneg %p70
        %p244 = pneg %p67
        %p245 = pneg %p91
        %p246 = pneg %p88
        %p247 = pneg %p112
        %p248 = pneg %p109
        %p249 = scmp.lt.s32.totalorder %s25, 1
        %s250 = scalar_select %p249, %s25, 1
        %p251 = scmp.lt.s32.totalorder %s26, 1
        %s252 = scalar_select %p251, %s26, 1
        %s253 = smul.addr %s250, 2
        %s254 = sadd.s32 %s252, %s253
        %s255 = smul.addr %s254, 4
        %s256 = scalar_lea.vmem %s4, %s255
        %p257 = pneg %p140
        %p258 = pneg %p137
        %p259 = pneg %p168
        %p260 = pneg %p165
        %s261 = sand.u32 %s155, 1
        %s262 = scalar_lea.sflag [#allocation4], %s261
        %s263 = sand.u32 %s155, 1
        %s264 = smul.addr %s263, 4
        %s265 = scalar_lea.vmem [#allocation7], %s264
        %p266 = scmp.lt.s32.totalorder %s25, 1
        %s267 = scalar_select %p266, %s25, 1
        %p268 = scmp.lt.s32.totalorder %s26, 1
        %s269 = scalar_select %p268, %s26, 1
        %s270 = smul.addr %s267, 2
        %s271 = sadd.s32 %s269, %s270
        %s272 = smul.addr %s271, 4
        %s273 = scalar_lea.vmem %s4, %s272
        %v274 = vld [vmem:[%s273] sm:$0xf]
        %v275 = vlaneseq
        %v276 = vand.u32 %v275, 127
        %vm277 = vcmp.lt.s32.totalorder %v276, 0
        %v278 = vsub.s32 0, %v276
        %v279 = vsel %vm277, %v278, %v276
        %v280 = vshrl.u32 %v279, 4
        %v281 = vand.u32 %v279, 15
        %v282 = vsub.s32 0, %v281
        %v283 = vsel %vm277, %v282, %v281
        %vm284 = vcmp.ne.s32.totalorder %v283, 0
        %vm285 = vcmp.lt.s32.totalorder %v283, 0
        %vm286 = vmand %vm285, %vm284
        %v287 = vadd.s32 %v283, 16
        %v288 = vsel %vm286, %v287, %v283
        %vm289 = vcmp.ge.s32.totalorder %v288, 1
        %vm290 = vcmp.lt.s32.totalorder %v288, 15
        %291 = vrot.lane.b32.xlu0 %v274, 1
        %v292 = vpop.permute.xlu0 %291
        %v293 = vsel %vm289, 1, 0
        %vm294 = vcmp.eq.s32.totalorder %v293, 1
        %v295 = vsel %vm294, %v292, 0.0
        %296 = vrot.lane.b32.xlu0 %v274, 127
        %v297 = vpop.permute.xlu0 %296
        %v298 = vsel %vm290, 1, 0
        %vm299 = vcmp.eq.s32.totalorder %v298, 1
        %v300 = vsel %vm299, %v297, 0.0
        %v301 = vld [vmem:[%s0] sm:$0xf]
        %v302 = vld [vmem:[#allocation2] sm:$0xf]
        %vm303 = vcmask 31744
        %v305 = vsel %vm303, %v302, 0
        %vm307 = vcmask 1043456
        %v309 = vsel %vm307, %v274, 0
        %311 = vmatprep.subr.mxu0 0.0
        %312 = vmatpush1.msra.mxu0 %v309
        %313 = vmatprep.subr.mxu0 0.0
        %314 = vmatpush1.msra.mxu0 0.0
        %315 = vmatprep.subr.mxu0 0.0
        %316 = vmatpush1.msra.mxu0 0.0
        %317 = vmatprep.subr.mxu0 0.0
        %318 = vmatpush1.msra.mxu0 0.0
        %319 = vmatprep.subr.mxu0 0.0
        %320 = vmatpush1.msra.mxu0 0.0
        %321 = vmatprep.subr.mxu0 0.0
        %322 = vmatpush1.msra.mxu0 0.0
        %323 = vmatprep.subr.mxu0 0.0
        %324 = vmatpush1.msra.mxu0 0.0
        %325 = vmatprep.subr.mxu0 0.0
        %326 = vmatpush1.msra.mxu0 0.0
        %327 = vmatprep.subr.mxu0 0.0
        %328 = vmatpush1.msra.mxu0 0.0
        %329 = vmatprep.subr.mxu0 0.0
        %330 = vmatpush1.msra.mxu0 0.0
        %331 = vmatprep.subr.mxu0 0.0
        %332 = vmatpush1.msra.mxu0 0.0
        %333 = vmatprep.subr.mxu0 0.0
        %334 = vmatpush1.msra.mxu0 0.0
        %335 = vmatprep.subr.mxu0 0.0
        %336 = vmatpush1.msra.mxu0 0.0
        %337 = vmatprep.subr.mxu0 0.0
        %338 = vmatpush1.msra.mxu0 0.0
        %339 = vmatprep.subr.mxu0 0.0
        %340 = vmatpush1.msra.mxu0 0.0
        %341 = vmatprep.subr.mxu0 0.0
        %342 = vmatpush1.msra.mxu0 0.0
        %343 = vmatprep.subr.mxu0 0.0
        %344 = vmatpush1.msra.mxu0 0.0
        %345 = vmatprep.subr.mxu0 0.0
        %346 = vmatpush1.msra.mxu0 0.0
        %347 = vmatprep.subr.mxu0 0.0
        %348 = vmatpush1.msra.mxu0 0.0
        %349 = vmatprep.subr.mxu0 0.0
        %350 = vmatpush1.msra.mxu0 0.0
        %351 = vmatprep.subr.mxu0 0.0
        %352 = vmatpush1.msra.mxu0 0.0
        %353 = vmatprep.subr.mxu0 0.0
        %354 = vmatpush1.msra.mxu0 0.0
        %355 = vmatprep.subr.mxu0 0.0
        %356 = vmatpush1.msra.mxu0 0.0
        %357 = vmatprep.subr.mxu0 0.0
        %358 = vmatpush1.msra.mxu0 0.0
        %359 = vmatprep.subr.mxu0 0.0
        %360 = vmatpush1.msra.mxu0 0.0
        %361 = vmatprep.subr.mxu0 0.0
        %362 = vmatpush1.msra.mxu0 0.0
        %363 = vmatprep.subr.mxu0 0.0
        %364 = vmatpush1.msra.mxu0 0.0
        %365 = vmatprep.subr.mxu0 0.0
        %366 = vmatpush1.msra.mxu0 0.0
        %367 = vmatprep.subr.mxu0 0.0
        %368 = vmatpush1.msra.mxu0 0.0
        %369 = vmatprep.subr.mxu0 0.0
        %370 = vmatpush1.msra.mxu0 0.0
        %371 = vmatprep.subr.mxu0 0.0
        %372 = vmatpush1.msra.mxu0 0.0
        %373 = vmatprep.subr.mxu0 0.0
        %374 = vmatpush1.msra.mxu0 0.0
        %375 = vmatprep.mubr.f32.mxu0 0.0
        %376 = vmatmul.mubr.f32.gmra.mrb[0].mxu0 %v305
        %v377 = vpop.f32.mrb[0].mxu0
        %v378 = vadd.f32 0.0, %v377
        %v379 = vpop.f32.mrb[0].mxu0
        %380 = vdwg.mxu0
        %v382 = vsel %vm303, %v301, 0
        %v385 = vsel %vm307, %v295, 0
        %387 = vmatprep.subr.mxu0 0.0
        %388 = vmatpush1.msra.mxu0 %v385
        %389 = vmatprep.subr.mxu0 0.0
        %390 = vmatpush1.msra.mxu0 0.0
        %391 = vmatprep.subr.mxu0 0.0
        %392 = vmatpush1.msra.mxu0 0.0
        %393 = vmatprep.subr.mxu0 0.0
        %394 = vmatpush1.msra.mxu0 0.0
        %395 = vmatprep.subr.mxu0 0.0
        %396 = vmatpush1.msra.mxu0 0.0
        %397 = vmatprep.subr.mxu0 0.0
        %398 = vmatpush1.msra.mxu0 0.0
        %399 = vmatprep.subr.mxu0 0.0
        %400 = vmatpush1.msra.mxu0 0.0
        %401 = vmatprep.subr.mxu0 0.0
        %402 = vmatpush1.msra.mxu0 0.0
        %403 = vmatprep.subr.mxu0 0.0
        %404 = vmatpush1.msra.mxu0 0.0
        %405 = vmatprep.subr.mxu0 0.0
        %406 = vmatpush1.msra.mxu0 0.0
        %407 = vmatprep.subr.mxu0 0.0
        %408 = vmatpush1.msra.mxu0 0.0
        %409 = vmatprep.subr.mxu0 0.0
        %410 = vmatpush1.msra.mxu0 0.0
        %411 = vmatprep.subr.mxu0 0.0
        %412 = vmatpush1.msra.mxu0 0.0
        %413 = vmatprep.subr.mxu0 0.0
        %414 = vmatpush1.msra.mxu0 0.0
        %415 = vmatprep.subr.mxu0 0.0
        %416 = vmatpush1.msra.mxu0 0.0
        %417 = vmatprep.subr.mxu0 0.0
        %418 = vmatpush1.msra.mxu0 0.0
        %419 = vmatprep.subr.mxu0 0.0
        %420 = vmatpush1.msra.mxu0 0.0
        %421 = vmatprep.subr.mxu0 0.0
        %422 = vmatpush1.msra.mxu0 0.0
        %423 = vmatprep.subr.mxu0 0.0
        %424 = vmatpush1.msra.mxu0 0.0
        %425 = vmatprep.subr.mxu0 0.0
        %426 = vmatpush1.msra.mxu0 0.0
        %427 = vmatprep.subr.mxu0 0.0
        %428 = vmatpush1.msra.mxu0 0.0
        %429 = vmatprep.subr.mxu0 0.0
        %430 = vmatpush1.msra.mxu0 0.0
        %431 = vmatprep.subr.mxu0 0.0
        %432 = vmatpush1.msra.mxu0 0.0
        %433 = vmatprep.subr.mxu0 0.0
        %434 = vmatpush1.msra.mxu0 0.0
        %435 = vmatprep.subr.mxu0 0.0
        %436 = vmatpush1.msra.mxu0 0.0
        %437 = vmatprep.subr.mxu0 0.0
        %438 = vmatpush1.msra.mxu0 0.0
        %439 = vmatprep.subr.mxu0 0.0
        %440 = vmatpush1.msra.mxu0 0.0
        %441 = vmatprep.subr.mxu0 0.0
        %442 = vmatpush1.msra.mxu0 0.0
        %443 = vmatprep.subr.mxu0 0.0
        %444 = vmatpush1.msra.mxu0 0.0
        %445 = vmatprep.subr.mxu0 0.0
        %446 = vmatpush1.msra.mxu0 0.0
        %447 = vmatprep.subr.mxu0 0.0
        %448 = vmatpush1.msra.mxu0 0.0
        %449 = vmatprep.subr.mxu0 0.0
        %450 = vmatpush1.msra.mxu0 0.0
        %451 = vmatprep.mubr.f32.mxu0 0.0
        %452 = vmatmul.mubr.f32.gmra.mrb[0].mxu0 %v382
        %v453 = vpop.f32.mrb[0].mxu0
        %v454 = vadd.f32 %v378, %v453
        %v455 = vpop.f32.mrb[0].mxu0
        %456 = vdwg.mxu0
        %v457 = vld [vmem:[#allocation5] sm:$0xf]
        %v459 = vsel %vm303, %v457, 0
        %v462 = vsel %vm307, %v300, 0
        %464 = vmatprep.subr.mxu0 0.0
        %465 = vmatpush1.msra.mxu0 %v462
        %466 = vmatprep.subr.mxu0 0.0
        %467 = vmatpush1.msra.mxu0 0.0
        %468 = vmatprep.subr.mxu0 0.0
        %469 = vmatpush1.msra.mxu0 0.0
        %470 = vmatprep.subr.mxu0 0.0
        %471 = vmatpush1.msra.mxu0 0.0
        %472 = vmatprep.subr.mxu0 0.0
        %473 = vmatpush1.msra.mxu0 0.0
        %474 = vmatprep.subr.mxu0 0.0
        %475 = vmatpush1.msra.mxu0 0.0
        %476 = vmatprep.subr.mxu0 0.0
        %477 = vmatpush1.msra.mxu0 0.0
        %478 = vmatprep.subr.mxu0 0.0
        %479 = vmatpush1.msra.mxu0 0.0
        %480 = vmatprep.subr.mxu0 0.0
        %481 = vmatpush1.msra.mxu0 0.0
        %482 = vmatprep.subr.mxu0 0.0
        %483 = vmatpush1.msra.mxu0 0.0
        %484 = vmatprep.subr.mxu0 0.0
        %485 = vmatpush1.msra.mxu0 0.0
        %486 = vmatprep.subr.mxu0 0.0
        %487 = vmatpush1.msra.mxu0 0.0
        %488 = vmatprep.subr.mxu0 0.0
        %489 = vmatpush1.msra.mxu0 0.0
        %490 = vmatprep.subr.mxu0 0.0
        %491 = vmatpush1.msra.mxu0 0.0
        %492 = vmatprep.subr.mxu0 0.0
        %493 = vmatpush1.msra.mxu0 0.0
        %494 = vmatprep.subr.mxu0 0.0
        %495 = vmatpush1.msra.mxu0 0.0
        %496 = vmatprep.subr.mxu0 0.0
        %497 = vmatpush1.msra.mxu0 0.0
        %498 = vmatprep.subr.mxu0 0.0
        %499 = vmatpush1.msra.mxu0 0.0
        %500 = vmatprep.subr.mxu0 0.0
        %501 = vmatpush1.msra.mxu0 0.0
        %502 = vmatprep.subr.mxu0 0.0
        %503 = vmatpush1.msra.mxu0 0.0
        %504 = vmatprep.subr.mxu0 0.0
        %505 = vmatpush1.msra.mxu0 0.0
        %506 = vmatprep.subr.mxu0 0.0
        %507 = vmatpush1.msra.mxu0 0.0
        %508 = vmatprep.subr.mxu0 0.0
        %509 = vmatpush1.msra.mxu0 0.0
        %510 = vmatprep.subr.mxu0 0.0
        %511 = vmatpush1.msra.mxu0 0.0
        %512 = vmatprep.subr.mxu0 0.0
        %513 = vmatpush1.msra.mxu0 0.0
        %514 = vmatprep.subr.mxu0 0.0
        %515 = vmatpush1.msra.mxu0 0.0
        %516 = vmatprep.subr.mxu0 0.0
        %517 = vmatpush1.msra.mxu0 0.0
        %518 = vmatprep.subr.mxu0 0.0
        %519 = vmatpush1.msra.mxu0 0.0
        %520 = vmatprep.subr.mxu0 0.0
        %521 = vmatpush1.msra.mxu0 0.0
        %522 = vmatprep.subr.mxu0 0.0
        %523 = vmatpush1.msra.mxu0 0.0
        %524 = vmatprep.subr.mxu0 0.0
        %525 = vmatpush1.msra.mxu0 0.0
        %526 = vmatprep.subr.mxu0 0.0
        %527 = vmatpush1.msra.mxu0 0.0
        %528 = vmatprep.mubr.f32.mxu0 0.0
        %529 = vmatmul.mubr.f32.gmra.mrb[0].mxu0 %v459
        %v530 = vpop.f32.mrb[0].mxu0
        %v531 = vadd.f32 0.0, %v530
        %v532 = vpop.f32.mrb[0].mxu0
        %533 = vdwg.mxu0
        %v534 = vadd.f32 %v454, %v531
        %v535 = vld [vmem:[%s3] sm:$0xf]
        %537 = vset.pattern.permute.xlu0 0
        %538 = vperm.xlu0 %537, %v535
        %v539 = vpop.permute.xlu0 %538
        %v541 = vadd.f32 %v534, %v539
        %v542 = vmax.f32 %v541, 0.0
        %543 = vst [vmem:[%s265] sm:$0xf] %v542
        %s544 = sand.u32 %s155, 1
        %s545 = scalar_lea.sflag [#allocation4], %s544
        %s546 = sand.u32 %s155, 1
        %s547 = smul.addr %s546, 4
        %s548 = scalar_lea.vmem [#allocation7], %s547
        // Predicated region
        $region49: #{tpu_custom_call.1} parent=39 // pred_check
          %p549 = pneg %p165
        $region50: #{tpu_custom_call.1} parent=39 // pred_check_branch
          %551 = sbr.rel (%p549) target = $region52
        $region51: #{tpu_custom_call.1} parent=39 // pred_region
          %s553 = ssub.s32 64, 64
          %554 = vsyncadd %s545, %s553
          %s555 = smul.addr %s25, 2
          %s556 = sadd.s32 %s26, %s555
          %s557 = smul.addr %s556, 64
          %s558 = scalar_lea.hbm %s5, %s557
          %s560 = sshll.u32 %s548, 4
          %s561 = int_to_ptr.vmem [resolvable:$true] %s560
          %563 = dma.vmem_to_hbm [thread:$0]  %s561, 64, %s558, %s545
        $region52: #{tpu_custom_call.1} parent=39 // pred_fallthru
          _
      $region40: #{tpu_custom_call.1} parent=5 // pred_fallthru
        _
      %p564 = scmp.le.s32.totalorder 2, %s16
      // Predicated region
      $region53: #{tpu_custom_call.1} parent=5 // pred_check
        %p565 = pneg %p564
      $region54: #{tpu_custom_call.1} parent=5 // pred_check_branch
        %567 = sbr.rel (%p565) target = $region56
      $region55: #{tpu_custom_call.1} parent=5 // pred_region
        %s568 = ssub.s32 %s16, 2
        // Predicated region
        $region57: #{tpu_custom_call.1} parent=55 // pred_check
          %p569 = pneg %p171
        $region58: #{tpu_custom_call.1} parent=55 // pred_check_branch
          %571 = sbr.rel (%p569) target = $region60
        $region59: #{tpu_custom_call.1} parent=55 // pred_region
          %s572 = sand.u32 %s156, 1
          %s573 = scalar_lea.sflag [#allocation4], %s572
          %s574 = sand.u32 %s156, 1
          %s575 = smul.addr %s574, 4
          %s576 = scalar_lea.vmem [#allocation7], %s575
          %577 = dma.done %s573, 64
        $region60: #{tpu_custom_call.1} parent=55 // pred_fallthru
          _
      $region56: #{tpu_custom_call.1} parent=5 // pred_fallthru
        _
    $region6: #{tpu_custom_call.1} parent=1 // loop_footer
      %s20 = sadd.s32 1, %s16
    $region7: #{tpu_custom_call.1} parent=1 // loop_footer_branch
      %15 = sbr.rel target = $region3
    $region8: #{tpu_custom_call.1} parent=1 // loop_exit
      _
    %578 = vsyncpa [#allocation3], 1
    %s579 = scalar_lea.sflag [#allocation3], 1
    %580 = vsyncpa %s579, 1
    %581 = vsyncpa [#allocation6], 1
    %582 = vsyncpa [#allocation4], 1
    %s583 = scalar_lea.sflag [#allocation4], 1
    %584 = vsyncpa %s583, 1

</llo_original>
